<compile_context>
chip_gen: v7x
topology: tpu7x:2x2x1
jax: 0.10.0
libtpu: 0.0.40
codegen_flags: <defaults>
</compile_context>

<pallas_src>
import jax
import jax.numpy as jnp
from jax.experimental import pallas as pl
from jax.experimental.pallas import tpu as pltpu


# bf16 MXU operands + f32 accumulation (per review: helps v6e/v7x MXU pass
# count; elementwise/state math stays f32 so v5e is not hurt).  Set to
# jnp.float32 for bit-closer-to-reference results.
MXU_OPERAND_DTYPE = jnp.bfloat16


def _round_up(x, m):
    return ((x + m - 1) // m) * m


def lstm_classifier_kernel(x_ref, w_ih_ref, w_hh_ref, b_ref,
                           w_out_ref, b_out_ref, out_ref):
    """Single-invocation LSTM + linear head.

    x_ref     : (T*Bp, E)  MXU dtype, time-major rows [t0 batch | t1 batch | ...]
    w_ih_ref  : (E, 4H)    MXU dtype, gate-packed columns [i | f | g | o]
    w_hh_ref  : (H, 4H)    MXU dtype, gate-packed columns [i | f | g | o]
    b_ref     : (1, 4H)    f32, combined b_ih + b_hh
    w_out_ref : (H, Cp)    f32, class columns zero-padded to a 128-lane boundary
    b_out_ref : (1, Cp)    f32
    out_ref   : (Bp, Cp)   f32, lane-dense logits (real classes in [:, :C])
    """
    H, G = w_hh_ref.shape                       # G = 4*H (packed gate width)
    Bp, _ = out_ref.shape
    TB, _ = x_ref.shape
    T = TB // Bp

    # ---- Hoisted input projection: one MXU matmul for all T steps ----------
    # bf16 operands, f32 accumulation.  Kept as an SSA value (no scratch).
    gates_x = jnp.dot(x_ref[...], w_ih_ref[...],
                      preferred_element_type=jnp.float32) + b_ref[...]

    # Hoist loop-invariant loads / masks out of the recurrence.
    w_hh = w_hh_ref[...]                                    # (H, 4H) MXU dtype
    lane = jax.lax.broadcasted_iota(jnp.int32, (Bp, G), 1)
    is_g = (lane >= 2 * H) & (lane < 3 * H)                 # g-gate lanes -> tanh

    # h_0 = c_0 = ones, as in the PyTorch forward.
    h = jnp.ones((Bp, H), jnp.float32)
    c = jnp.ones((Bp, H), jnp.float32)

    # ---- Serial recurrence: only h @ W_hh on the critical path -------------
    # T is tiny -> full static unroll so the LLO scheduler sees across steps.
    # TODO(synk): hold W_hh weight-stationary across steps with
    #   pltpu.matmul_push_rhs / matmul_acc_lhs / matmul_pop (needs bundle-dump
    #   validation); for long T switch to a T-chunked grid ('arbitrary' axis,
    #   h/c in resident VMEM scratch, bounded-unroll fori_loop) and on v7x add
    #   a 'parallel' batch grid axis once B >= ~16.
    for t in range(T):
        gates = gates_x[t * Bp:(t + 1) * Bp] + jnp.dot(
            h.astype(w_hh.dtype), w_hh, preferred_element_type=jnp.float32)
        # 2 EUP pushes over the whole packed gates vreg instead of 4 sliced ones.
        act = jnp.where(is_g, jnp.tanh(gates), jax.nn.sigmoid(gates))
        i_g = act[:, 0 * H:1 * H]
        f_g = act[:, 1 * H:2 * H]
        g_g = act[:, 2 * H:3 * H]
        o_g = act[:, 3 * H:4 * H]
        c = f_g * c + i_g * g_g
        h = o_g * jnp.tanh(c)

    # ---- Final linear head; (Bp, Cp) store is lane-dense & unmasked --------
    out_ref[...] = (jnp.dot(h, w_out_ref[...],
                            preferred_element_type=jnp.float32)
                    + b_out_ref[...])


def prepare_params(w_ih, w_hh, b, w_out, b_out):
    """One-time packing / padding / casting of the static weights.

    w_ih : (E, 4H)  = torch weight_ih_l0.T  (gate order [i, f, g, o])
    w_hh : (H, 4H)  = torch weight_hh_l0.T
    b    : (1, 4H)  = bias_ih_l0 + bias_hh_l0
    w_out: (H, C)   = label.weight.T
    b_out: (1, C)   = label.bias
    """
    H = w_hh.shape[0]
    C = w_out.shape[1]
    assert w_ih.shape[1] == 4 * H and w_hh.shape[1] == 4 * H
    assert H % 8 == 0 and w_ih.shape[0] % 8 == 0, "E and H must be sublane-aligned"
    Cp = _round_up(C, 128)          # lane-dense output store
    return dict(
        w_ih=w_ih.astype(MXU_OPERAND_DTYPE),
        w_hh=w_hh.astype(MXU_OPERAND_DTYPE),
        b=b.astype(jnp.float32),
        w_out=jnp.pad(w_out.astype(jnp.float32), ((0, 0), (0, Cp - C))),
        b_out=jnp.pad(b_out.astype(jnp.float32), ((0, 0), (0, Cp - C))),
        num_classes=C,
    )


def lstm_classifier_forward(x_emb_tmajor, params):
    """x_emb_tmajor: (T, B, E) float32 time-major embedded sequence -> (B, C)."""
    T, B, E = x_emb_tmajor.shape
    Cp = params["w_out"].shape[1]
    C = params["num_classes"]

    # Sublane-align the batch (zero rows are sliced off afterwards; exact).
    # The (T, Bp, E) -> (T*Bp, E) flatten is done here in the wrapper.
    Bp = _round_up(B, 8)
    x_p = jnp.pad(x_emb_tmajor.astype(jnp.float32),
                  ((0, 0), (0, Bp - B), (0, 0)))
    x2d = x_p.reshape(T * Bp, E).astype(MXU_OPERAND_DTYPE)

    # Tiny problem: all operands (a few KiB) are staged whole in VMEM, single
    # kernel invocation, no grid.
    # TODO(synk): for long T / large B, pipeline x in T-chunks via BlockSpec
    #   and set pltpu.CompilerParams(vmem_limit_bytes=...) (v7x VMEM is 64 MiB).
    vmem = pl.BlockSpec(memory_space=pltpu.MemorySpace.VMEM)
    out_p = pl.pallas_call(
        lstm_classifier_kernel,
        out_shape=jax.ShapeDtypeStruct((Bp, Cp), jnp.float32),
        in_specs=[vmem] * 6,
        out_specs=vmem,
    )(x2d, params["w_ih"], params["w_hh"], params["b"],
      params["w_out"], params["b_out"])

    return out_p[:B, :C]


def reference_forward(x_emb_tmajor, w_ih, w_hh, b, w_out, b_out):
    """Pure-JAX f32 reference (same math, unpadded / unpacked)."""
    T, B, E = x_emb_tmajor.shape
    H = w_hh.shape[0]

    def step(carry, x_t):
        h, c = carry
        gates = x_t @ w_ih + h @ w_hh + b
        i = jax.nn.sigmoid(gates[:, 0 * H:1 * H])
        f = jax.nn.sigmoid(gates[:, 1 * H:2 * H])
        g = jnp.tanh(gates[:, 2 * H:3 * H])
        o = jax.nn.sigmoid(gates[:, 3 * H:4 * H])
        c = f * c + i * g
        h = o * jnp.tanh(c)
        return (h, c), None

    h0 = jnp.ones((B, H), jnp.float32)
    c0 = jnp.ones((B, H), jnp.float32)
    (h_final, _), _ = jax.lax.scan(step, (h0, c0), x_emb_tmajor)
    return h_final @ w_out + b_out


if __name__ == "__main__":
    # Small config consistent with the module:
    B = 4        # batch_size
    T = 8        # num_sequences (sequence length)
    E = 32       # embedding_length (word2vec embed_size)
    H = 32       # hidden_size (= config.embedding_dim)
    C = 2        # output_size / num_classes (pos, neg)
    V = 50       # vocab_size (incl. index-0 "unknown" row of zeros)

    key = jax.random.PRNGKey(0)
    k_emb, k_ih, k_hh, k_b, k_out, k_bo, k_tok = jax.random.split(key, 7)

    # Deterministic parameter init (synthetic stand-ins for pretrained weights).
    emb_table = jax.random.normal(k_emb, (V, E), jnp.float32) * 0.1
    emb_table = emb_table.at[0].set(0.0)  # unknown_word row = zeros

    w_ih = jax.random.normal(k_ih, (E, 4 * H), jnp.float32) * 0.1   # weight_ih_l0.T
    w_hh = jax.random.normal(k_hh, (H, 4 * H), jnp.float32) * 0.1   # weight_hh_l0.T
    b = jax.random.normal(k_b, (1, 4 * H), jnp.float32) * 0.1       # b_ih + b_hh
    w_out = jax.random.normal(k_out, (H, C), jnp.float32) * 0.1     # label.weight.T
    b_out = jax.random.normal(k_bo, (1, C), jnp.float32) * 0.1      # label.bias

    # Input sentences: integer token ids, shape (batch_size, num_sequences).
    tok_ids = jax.random.randint(k_tok, (B, T), 0, V)

    # Glue in plain JAX: embedding lookup (gather) + permute(1, 0, 2) to
    # time-major (T, B, E), matching the PyTorch forward.
    x_emb = jnp.take(emb_table, tok_ids, axis=0)                # (B, T, E)
    x_emb_tmajor = jnp.transpose(x_emb, (1, 0, 2)).astype(jnp.float32)

    params = prepare_params(w_ih, w_hh, b, w_out, b_out)        # one-time pack
    logits = lstm_classifier_forward(x_emb_tmajor, params)
    logits = jax.block_until_ready(logits)

    ref = reference_forward(x_emb_tmajor, w_ih, w_hh, b, w_out, b_out)
    assert logits.shape == (B, C)
    # bf16 MXU operands (f32 accumulation / f32 state) vs. the pure-f32
    # reference: tolerance loosened per review.
    assert jnp.allclose(logits, ref, atol=1e-2, rtol=1e-2), (
        float(jnp.max(jnp.abs(logits - ref))))

    print("KERNEL_OK")
</pallas_src>

<mosaic_0001>
module attributes {stable_mosaic.version = 11 : i64} {
  func.func @lstm_classifier_kernel(%arg0: memref<64x32xbf16, #tpu.memory_space<vmem>>, %arg1: memref<32x128xbf16, #tpu.memory_space<vmem>>, %arg2: memref<32x128xbf16, #tpu.memory_space<vmem>>, %arg3: memref<1x128xf32, #tpu.memory_space<vmem>>, %arg4: memref<32x128xf32, #tpu.memory_space<vmem>>, %arg5: memref<1x128xf32, #tpu.memory_space<vmem>>, %arg6: memref<8x128xf32, #tpu.memory_space<vmem>>) attributes {dimension_semantics = [], scalar_prefetch = 0 : i64, scratch_operands = 0 : i64, tpu.core_type = #tpu.core_type<tc>} {
    %c0 = arith.constant 0 : index
    %c0_0 = arith.constant 0 : index
    %0 = vector.load %arg0[%c0, %c0_0] : memref<64x32xbf16, #tpu.memory_space<vmem>>, vector<64x32xbf16>
    %c0_1 = arith.constant 0 : index
    %c0_2 = arith.constant 0 : index
    %1 = vector.load %arg1[%c0_1, %c0_2] : memref<32x128xbf16, #tpu.memory_space<vmem>>, vector<32x128xbf16>
    %cst = arith.constant dense<0.000000e+00> : vector<64x128xf32>
    %2 = tpu.matmul %0, %1, %cst {dimension_numbers = #tpu.dot_dimension_numbers<[1], [0], [0], [1], [0, 0, 1, 1], [], []>} : vector<64x32xbf16>, vector<32x128xbf16>, vector<64x128xf32> -> vector<64x128xf32>
    %c0_3 = arith.constant 0 : index
    %c0_4 = arith.constant 0 : index
    %3 = vector.load %arg3[%c0_3, %c0_4] : memref<1x128xf32, #tpu.memory_space<vmem>>, vector<1x128xf32>
    %4 = vector.broadcast %3 : vector<1x128xf32> to vector<64x128xf32>
    %5 = arith.addf %2, %4 : vector<64x128xf32>
    %c0_5 = arith.constant 0 : index
    %c0_6 = arith.constant 0 : index
    %6 = vector.load %arg2[%c0_5, %c0_6] : memref<32x128xbf16, #tpu.memory_space<vmem>>, vector<32x128xbf16>
    %7 = tpu.iota {dimensions = array<i32: 1>} : vector<8x128xi32>
    %c64_i32 = arith.constant 64 : i32
    %8 = vector.broadcast %c64_i32 : i32 to vector<8x128xi32>
    %9 = arith.cmpi sge, %7, %8 : vector<8x128xi32>
    %c96_i32 = arith.constant 96 : i32
    %10 = vector.broadcast %c96_i32 : i32 to vector<8x128xi32>
    %11 = arith.cmpi slt, %7, %10 : vector<8x128xi32>
    %12 = arith.andi %9, %11 : vector<8x128xi1>
    %cst_7 = arith.constant 1.000000e+00 : f32
    %13 = vector.broadcast %cst_7 : f32 to vector<8x32xf32>
    %cst_8 = arith.constant 1.000000e+00 : f32
    %14 = vector.broadcast %cst_8 : f32 to vector<8x32xf32>
    %15 = vector.extract_strided_slice %5 {offsets = [0, 0], sizes = [8, 128], strides = [1, 1]} : vector<64x128xf32> to vector<8x128xf32>
    %16 = arith.truncf %13 : vector<8x32xf32> to vector<8x32xbf16>
    %cst_9 = arith.constant dense<0.000000e+00> : vector<8x128xf32>
    %17 = tpu.matmul %16, %6, %cst_9 {dimension_numbers = #tpu.dot_dimension_numbers<[1], [0], [0], [1], [0, 0, 1, 1], [], []>} : vector<8x32xbf16>, vector<32x128xbf16>, vector<8x128xf32> -> vector<8x128xf32>
    %18 = arith.addf %15, %17 : vector<8x128xf32>
    %19 = math.tanh %18 : vector<8x128xf32>
    %20 = arith.negf %18 : vector<8x128xf32>
    %21 = math.exp %20 : vector<8x128xf32>
    %cst_10 = arith.constant 1.000000e+00 : f32
    %22 = vector.broadcast %cst_10 : f32 to vector<8x128xf32>
    %23 = arith.addf %22, %21 : vector<8x128xf32>
    %24 = arith.divf %22, %23 : vector<8x128xf32>
    %25 = arith.select %12, %19, %24 : vector<8x128xi1>, vector<8x128xf32>
    %26 = vector.extract_strided_slice %25 {offsets = [0, 0], sizes = [8, 32], strides = [1, 1]} : vector<8x128xf32> to vector<8x32xf32>
    %27 = vector.extract_strided_slice %25 {offsets = [0, 32], sizes = [8, 32], strides = [1, 1]} : vector<8x128xf32> to vector<8x32xf32>
    %28 = vector.extract_strided_slice %25 {offsets = [0, 64], sizes = [8, 32], strides = [1, 1]} : vector<8x128xf32> to vector<8x32xf32>
    %29 = vector.extract_strided_slice %25 {offsets = [0, 96], sizes = [8, 32], strides = [1, 1]} : vector<8x128xf32> to vector<8x32xf32>
    %30 = arith.mulf %27, %14 : vector<8x32xf32>
    %31 = arith.mulf %26, %28 : vector<8x32xf32>
    %32 = arith.addf %30, %31 : vector<8x32xf32>
    %33 = math.tanh %32 : vector<8x32xf32>
    %34 = arith.mulf %29, %33 : vector<8x32xf32>
    %35 = vector.extract_strided_slice %5 {offsets = [8, 0], sizes = [8, 128], strides = [1, 1]} : vector<64x128xf32> to vector<8x128xf32>
    %36 = arith.truncf %34 : vector<8x32xf32> to vector<8x32xbf16>
    %cst_11 = arith.constant dense<0.000000e+00> : vector<8x128xf32>
    %37 = tpu.matmul %36, %6, %cst_11 {dimension_numbers = #tpu.dot_dimension_numbers<[1], [0], [0], [1], [0, 0, 1, 1], [], []>} : vector<8x32xbf16>, vector<32x128xbf16>, vector<8x128xf32> -> vector<8x128xf32>
    %38 = arith.addf %35, %37 : vector<8x128xf32>
    %39 = math.tanh %38 : vector<8x128xf32>
    %40 = arith.negf %38 : vector<8x128xf32>
    %41 = math.exp %40 : vector<8x128xf32>
    %cst_12 = arith.constant 1.000000e+00 : f32
    %42 = vector.broadcast %cst_12 : f32 to vector<8x128xf32>
    %43 = arith.addf %42, %41 : vector<8x128xf32>
    %44 = arith.divf %42, %43 : vector<8x128xf32>
    %45 = arith.select %12, %39, %44 : vector<8x128xi1>, vector<8x128xf32>
    %46 = vector.extract_strided_slice %45 {offsets = [0, 0], sizes = [8, 32], strides = [1, 1]} : vector<8x128xf32> to vector<8x32xf32>
    %47 = vector.extract_strided_slice %45 {offsets = [0, 32], sizes = [8, 32], strides = [1, 1]} : vector<8x128xf32> to vector<8x32xf32>
    %48 = vector.extract_strided_slice %45 {offsets = [0, 64], sizes = [8, 32], strides = [1, 1]} : vector<8x128xf32> to vector<8x32xf32>
    %49 = vector.extract_strided_slice %45 {offsets = [0, 96], sizes = [8, 32], strides = [1, 1]} : vector<8x128xf32> to vector<8x32xf32>
    %50 = arith.mulf %47, %32 : vector<8x32xf32>
    %51 = arith.mulf %46, %48 : vector<8x32xf32>
    %52 = arith.addf %50, %51 : vector<8x32xf32>
    %53 = math.tanh %52 : vector<8x32xf32>
    %54 = arith.mulf %49, %53 : vector<8x32xf32>
    %55 = vector.extract_strided_slice %5 {offsets = [16, 0], sizes = [8, 128], strides = [1, 1]} : vector<64x128xf32> to vector<8x128xf32>
    %56 = arith.truncf %54 : vector<8x32xf32> to vector<8x32xbf16>
    %cst_13 = arith.constant dense<0.000000e+00> : vector<8x128xf32>
    %57 = tpu.matmul %56, %6, %cst_13 {dimension_numbers = #tpu.dot_dimension_numbers<[1], [0], [0], [1], [0, 0, 1, 1], [], []>} : vector<8x32xbf16>, vector<32x128xbf16>, vector<8x128xf32> -> vector<8x128xf32>
    %58 = arith.addf %55, %57 : vector<8x128xf32>
    %59 = math.tanh %58 : vector<8x128xf32>
    %60 = arith.negf %58 : vector<8x128xf32>
    %61 = math.exp %60 : vector<8x128xf32>
    %cst_14 = arith.constant 1.000000e+00 : f32
    %62 = vector.broadcast %cst_14 : f32 to vector<8x128xf32>
    %63 = arith.addf %62, %61 : vector<8x128xf32>
    %64 = arith.divf %62, %63 : vector<8x128xf32>
    %65 = arith.select %12, %59, %64 : vector<8x128xi1>, vector<8x128xf32>
    %66 = vector.extract_strided_slice %65 {offsets = [0, 0], sizes = [8, 32], strides = [1, 1]} : vector<8x128xf32> to vector<8x32xf32>
    %67 = vector.extract_strided_slice %65 {offsets = [0, 32], sizes = [8, 32], strides = [1, 1]} : vector<8x128xf32> to vector<8x32xf32>
    %68 = vector.extract_strided_slice %65 {offsets = [0, 64], sizes = [8, 32], strides = [1, 1]} : vector<8x128xf32> to vector<8x32xf32>
    %69 = vector.extract_strided_slice %65 {offsets = [0, 96], sizes = [8, 32], strides = [1, 1]} : vector<8x128xf32> to vector<8x32xf32>
    %70 = arith.mulf %67, %52 : vector<8x32xf32>
    %71 = arith.mulf %66, %68 : vector<8x32xf32>
    %72 = arith.addf %70, %71 : vector<8x32xf32>
    %73 = math.tanh %72 : vector<8x32xf32>
    %74 = arith.mulf %69, %73 : vector<8x32xf32>
    %75 = vector.extract_strided_slice %5 {offsets = [24, 0], sizes = [8, 128], strides = [1, 1]} : vector<64x128xf32> to vector<8x128xf32>
    %76 = arith.truncf %74 : vector<8x32xf32> to vector<8x32xbf16>
    %cst_15 = arith.constant dense<0.000000e+00> : vector<8x128xf32>
    %77 = tpu.matmul %76, %6, %cst_15 {dimension_numbers = #tpu.dot_dimension_numbers<[1], [0], [0], [1], [0, 0, 1, 1], [], []>} : vector<8x32xbf16>, vector<32x128xbf16>, vector<8x128xf32> -> vector<8x128xf32>
    %78 = arith.addf %75, %77 : vector<8x128xf32>
    %79 = math.tanh %78 : vector<8x128xf32>
    %80 = arith.negf %78 : vector<8x128xf32>
    %81 = math.exp %80 : vector<8x128xf32>
    %cst_16 = arith.constant 1.000000e+00 : f32
    %82 = vector.broadcast %cst_16 : f32 to vector<8x128xf32>
    %83 = arith.addf %82, %81 : vector<8x128xf32>
    %84 = arith.divf %82, %83 : vector<8x128xf32>
    %85 = arith.select %12, %79, %84 : vector<8x128xi1>, vector<8x128xf32>
    %86 = vector.extract_strided_slice %85 {offsets = [0, 0], sizes = [8, 32], strides = [1, 1]} : vector<8x128xf32> to vector<8x32xf32>
    %87 = vector.extract_strided_slice %85 {offsets = [0, 32], sizes = [8, 32], strides = [1, 1]} : vector<8x128xf32> to vector<8x32xf32>
    %88 = vector.extract_strided_slice %85 {offsets = [0, 64], sizes = [8, 32], strides = [1, 1]} : vector<8x128xf32> to vector<8x32xf32>
    %89 = vector.extract_strided_slice %85 {offsets = [0, 96], sizes = [8, 32], strides = [1, 1]} : vector<8x128xf32> to vector<8x32xf32>
    %90 = arith.mulf %87, %72 : vector<8x32xf32>
    %91 = arith.mulf %86, %88 : vector<8x32xf32>
    %92 = arith.addf %90, %91 : vector<8x32xf32>
    %93 = math.tanh %92 : vector<8x32xf32>
    %94 = arith.mulf %89, %93 : vector<8x32xf32>
    %95 = vector.extract_strided_slice %5 {offsets = [32, 0], sizes = [8, 128], strides = [1, 1]} : vector<64x128xf32> to vector<8x128xf32>
    %96 = arith.truncf %94 : vector<8x32xf32> to vector<8x32xbf16>
    %cst_17 = arith.constant dense<0.000000e+00> : vector<8x128xf32>
    %97 = tpu.matmul %96, %6, %cst_17 {dimension_numbers = #tpu.dot_dimension_numbers<[1], [0], [0], [1], [0, 0, 1, 1], [], []>} : vector<8x32xbf16>, vector<32x128xbf16>, vector<8x128xf32> -> vector<8x128xf32>
    %98 = arith.addf %95, %97 : vector<8x128xf32>
    %99 = math.tanh %98 : vector<8x128xf32>
    %100 = arith.negf %98 : vector<8x128xf32>
    %101 = math.exp %100 : vector<8x128xf32>
    %cst_18 = arith.constant 1.000000e+00 : f32
    %102 = vector.broadcast %cst_18 : f32 to vector<8x128xf32>
    %103 = arith.addf %102, %101 : vector<8x128xf32>
    %104 = arith.divf %102, %103 : vector<8x128xf32>
    %105 = arith.select %12, %99, %104 : vector<8x128xi1>, vector<8x128xf32>
    %106 = vector.extract_strided_slice %105 {offsets = [0, 0], sizes = [8, 32], strides = [1, 1]} : vector<8x128xf32> to vector<8x32xf32>
    %107 = vector.extract_strided_slice %105 {offsets = [0, 32], sizes = [8, 32], strides = [1, 1]} : vector<8x128xf32> to vector<8x32xf32>
    %108 = vector.extract_strided_slice %105 {offsets = [0, 64], sizes = [8, 32], strides = [1, 1]} : vector<8x128xf32> to vector<8x32xf32>
    %109 = vector.extract_strided_slice %105 {offsets = [0, 96], sizes = [8, 32], strides = [1, 1]} : vector<8x128xf32> to vector<8x32xf32>
    %110 = arith.mulf %107, %92 : vector<8x32xf32>
    %111 = arith.mulf %106, %108 : vector<8x32xf32>
    %112 = arith.addf %110, %111 : vector<8x32xf32>
    %113 = math.tanh %112 : vector<8x32xf32>
    %114 = arith.mulf %109, %113 : vector<8x32xf32>
    %115 = vector.extract_strided_slice %5 {offsets = [40, 0], sizes = [8, 128], strides = [1, 1]} : vector<64x128xf32> to vector<8x128xf32>
    %116 = arith.truncf %114 : vector<8x32xf32> to vector<8x32xbf16>
    %cst_19 = arith.constant dense<0.000000e+00> : vector<8x128xf32>
    %117 = tpu.matmul %116, %6, %cst_19 {dimension_numbers = #tpu.dot_dimension_numbers<[1], [0], [0], [1], [0, 0, 1, 1], [], []>} : vector<8x32xbf16>, vector<32x128xbf16>, vector<8x128xf32> -> vector<8x128xf32>
    %118 = arith.addf %115, %117 : vector<8x128xf32>
    %119 = math.tanh %118 : vector<8x128xf32>
    %120 = arith.negf %118 : vector<8x128xf32>
    %121 = math.exp %120 : vector<8x128xf32>
    %cst_20 = arith.constant 1.000000e+00 : f32
    %122 = vector.broadcast %cst_20 : f32 to vector<8x128xf32>
    %123 = arith.addf %122, %121 : vector<8x128xf32>
    %124 = arith.divf %122, %123 : vector<8x128xf32>
    %125 = arith.select %12, %119, %124 : vector<8x128xi1>, vector<8x128xf32>
    %126 = vector.extract_strided_slice %125 {offsets = [0, 0], sizes = [8, 32], strides = [1, 1]} : vector<8x128xf32> to vector<8x32xf32>
    %127 = vector.extract_strided_slice %125 {offsets = [0, 32], sizes = [8, 32], strides = [1, 1]} : vector<8x128xf32> to vector<8x32xf32>
    %128 = vector.extract_strided_slice %125 {offsets = [0, 64], sizes = [8, 32], strides = [1, 1]} : vector<8x128xf32> to vector<8x32xf32>
    %129 = vector.extract_strided_slice %125 {offsets = [0, 96], sizes = [8, 32], strides = [1, 1]} : vector<8x128xf32> to vector<8x32xf32>
    %130 = arith.mulf %127, %112 : vector<8x32xf32>
    %131 = arith.mulf %126, %128 : vector<8x32xf32>
    %132 = arith.addf %130, %131 : vector<8x32xf32>
    %133 = math.tanh %132 : vector<8x32xf32>
    %134 = arith.mulf %129, %133 : vector<8x32xf32>
    %135 = vector.extract_strided_slice %5 {offsets = [48, 0], sizes = [8, 128], strides = [1, 1]} : vector<64x128xf32> to vector<8x128xf32>
    %136 = arith.truncf %134 : vector<8x32xf32> to vector<8x32xbf16>
    %cst_21 = arith.constant dense<0.000000e+00> : vector<8x128xf32>
    %137 = tpu.matmul %136, %6, %cst_21 {dimension_numbers = #tpu.dot_dimension_numbers<[1], [0], [0], [1], [0, 0, 1, 1], [], []>} : vector<8x32xbf16>, vector<32x128xbf16>, vector<8x128xf32> -> vector<8x128xf32>
    %138 = arith.addf %135, %137 : vector<8x128xf32>
    %139 = math.tanh %138 : vector<8x128xf32>
    %140 = arith.negf %138 : vector<8x128xf32>
    %141 = math.exp %140 : vector<8x128xf32>
    %cst_22 = arith.constant 1.000000e+00 : f32
    %142 = vector.broadcast %cst_22 : f32 to vector<8x128xf32>
    %143 = arith.addf %142, %141 : vector<8x128xf32>
    %144 = arith.divf %142, %143 : vector<8x128xf32>
    %145 = arith.select %12, %139, %144 : vector<8x128xi1>, vector<8x128xf32>
    %146 = vector.extract_strided_slice %145 {offsets = [0, 0], sizes = [8, 32], strides = [1, 1]} : vector<8x128xf32> to vector<8x32xf32>
    %147 = vector.extract_strided_slice %145 {offsets = [0, 32], sizes = [8, 32], strides = [1, 1]} : vector<8x128xf32> to vector<8x32xf32>
    %148 = vector.extract_strided_slice %145 {offsets = [0, 64], sizes = [8, 32], strides = [1, 1]} : vector<8x128xf32> to vector<8x32xf32>
    %149 = vector.extract_strided_slice %145 {offsets = [0, 96], sizes = [8, 32], strides = [1, 1]} : vector<8x128xf32> to vector<8x32xf32>
    %150 = arith.mulf %147, %132 : vector<8x32xf32>
    %151 = arith.mulf %146, %148 : vector<8x32xf32>
    %152 = arith.addf %150, %151 : vector<8x32xf32>
    %153 = math.tanh %152 : vector<8x32xf32>
    %154 = arith.mulf %149, %153 : vector<8x32xf32>
    %155 = vector.extract_strided_slice %5 {offsets = [56, 0], sizes = [8, 128], strides = [1, 1]} : vector<64x128xf32> to vector<8x128xf32>
    %156 = arith.truncf %154 : vector<8x32xf32> to vector<8x32xbf16>
    %cst_23 = arith.constant dense<0.000000e+00> : vector<8x128xf32>
    %157 = tpu.matmul %156, %6, %cst_23 {dimension_numbers = #tpu.dot_dimension_numbers<[1], [0], [0], [1], [0, 0, 1, 1], [], []>} : vector<8x32xbf16>, vector<32x128xbf16>, vector<8x128xf32> -> vector<8x128xf32>
    %158 = arith.addf %155, %157 : vector<8x128xf32>
    %159 = math.tanh %158 : vector<8x128xf32>
    %160 = arith.negf %158 : vector<8x128xf32>
    %161 = math.exp %160 : vector<8x128xf32>
    %cst_24 = arith.constant 1.000000e+00 : f32
    %162 = vector.broadcast %cst_24 : f32 to vector<8x128xf32>
    %163 = arith.addf %162, %161 : vector<8x128xf32>
    %164 = arith.divf %162, %163 : vector<8x128xf32>
    %165 = arith.select %12, %159, %164 : vector<8x128xi1>, vector<8x128xf32>
    %166 = vector.extract_strided_slice %165 {offsets = [0, 0], sizes = [8, 32], strides = [1, 1]} : vector<8x128xf32> to vector<8x32xf32>
    %167 = vector.extract_strided_slice %165 {offsets = [0, 32], sizes = [8, 32], strides = [1, 1]} : vector<8x128xf32> to vector<8x32xf32>
    %168 = vector.extract_strided_slice %165 {offsets = [0, 64], sizes = [8, 32], strides = [1, 1]} : vector<8x128xf32> to vector<8x32xf32>
    %169 = vector.extract_strided_slice %165 {offsets = [0, 96], sizes = [8, 32], strides = [1, 1]} : vector<8x128xf32> to vector<8x32xf32>
    %170 = arith.mulf %167, %152 : vector<8x32xf32>
    %171 = arith.mulf %166, %168 : vector<8x32xf32>
    %172 = arith.addf %170, %171 : vector<8x32xf32>
    %173 = math.tanh %172 : vector<8x32xf32>
    %174 = arith.mulf %169, %173 : vector<8x32xf32>
    %c0_25 = arith.constant 0 : index
    %c0_26 = arith.constant 0 : index
    %175 = vector.load %arg4[%c0_25, %c0_26] : memref<32x128xf32, #tpu.memory_space<vmem>>, vector<32x128xf32>
    %cst_27 = arith.constant dense<0.000000e+00> : vector<8x128xf32>
    %176 = tpu.matmul %174, %175, %cst_27 {dimension_numbers = #tpu.dot_dimension_numbers<[1], [0], [0], [1], [0, 0, 1, 1], [], []>} : vector<8x32xf32>, vector<32x128xf32>, vector<8x128xf32> -> vector<8x128xf32>
    %c0_28 = arith.constant 0 : index
    %c0_29 = arith.constant 0 : index
    %177 = vector.load %arg5[%c0_28, %c0_29] : memref<1x128xf32, #tpu.memory_space<vmem>>, vector<1x128xf32>
    %178 = vector.broadcast %177 : vector<1x128xf32> to vector<8x128xf32>
    %179 = arith.addf %176, %178 : vector<8x128xf32>
    %c0_30 = arith.constant 0 : index
    %c0_31 = arith.constant 0 : index
    %180 = vector.load %arg6[%c0_30, %c0_31] : memref<8x128xf32, #tpu.memory_space<vmem>>, vector<8x128xf32>
    tpu.vector_store %arg6[%c0_30, %c0_31], %179 {strides = array<i32>} : memref<8x128xf32, #tpu.memory_space<vmem>>, vector<8x128xf32>,
    return
  }
}

</mosaic_0001>

<llo_original>
// kernel: tpu_custom_call.1
$region0: #{tpu_custom_call.1}
  #allocation0 [shape = 'u32[]', space=smem, size = 0x4, offset = 0x4, fixed_abs, tag = 'smem constant byte address 0x4 - core index']
  #allocation1 [shape = 'u32[144,128]{1,0:T(1,128)}', space=vmem, size = 0x12000, scoped, tag = 'internal scratch']
  %s0 = inlined_call_operand.vmem [shape: bf16[64,32], index: 0, kind: input, shape index: {}]
  %s1 = inlined_call_operand.vmem [shape: bf16[32,128], index: 1, kind: input, shape index: {}]
  %s2 = inlined_call_operand.hbm [shape: bf16[32,128], index: 2, kind: input, shape index: {}]
  %s3 = inlined_call_operand.vmem [shape: f32[1,128], index: 3, kind: input, shape index: {}]
  %s4 = inlined_call_operand.vmem [shape: f32[32,128], index: 4, kind: input, shape index: {}]
  %s5 = inlined_call_operand.vmem [shape: f32[1,128], index: 5, kind: input, shape index: {}]
  %s6 = inlined_call_operand.hbm [shape: f32[8,128], index: 6, kind: output, shape index: {}]
  %s7 = sld [smem:[#allocation0]]
  $region38: #{tpu_custom_call.1} parent=0
    _
  %s9 = ssub.s32 1, %s7
  %s10 = scalar_select 0, %s9, %s7
  $region1: #{tpu_custom_call.1} parent=0
    #allocation2 [shape = 'u8[8192]{0}', space=vmem, size = 0x2000, scoped, tag = 'input window, operand 2, single buffered']
    #allocation3 [shape = 's32[1]{0}', space=sflag, size = 0x4, scoped, tag = 'scoped memory for tpu_custom_call.1']
    #allocation4 [shape = 's32[1]{0}', space=sflag, size = 0x4, scoped, tag = 'scoped memory for tpu_custom_call.1']
    #allocation5 [shape = 'u8[4096]{0}', space=vmem, size = 0x1000, scoped, tag = 'output window, operand 0, single buffered']
    %11 = vsyncpa [#allocation3], 0
    %12 = vsyncpa [#allocation4], 0
    // Predicated region
    $region2: #{tpu_custom_call.1} parent=1 // pred_check
      _
    $region3: #{tpu_custom_call.1} parent=1 // pred_check_branch
      %14 = sbr.rel (0) target = $region5
    $region4: #{tpu_custom_call.1} parent=1 // pred_region
      _
    $region5: #{tpu_custom_call.1} parent=1 // pred_fallthru
      _
    // Predicated region
    $region6: #{tpu_custom_call.1} parent=1 // pred_check
      _
    $region7: #{tpu_custom_call.1} parent=1 // pred_check_branch
      %16 = sbr.rel (0) target = $region9
    $region8: #{tpu_custom_call.1} parent=1 // pred_region
      _
    $region9: #{tpu_custom_call.1} parent=1 // pred_fallthru
      _
    // Predicated region
    $region10: #{tpu_custom_call.1} parent=1 // pred_check
      _
    $region11: #{tpu_custom_call.1} parent=1 // pred_check_branch
      %18 = sbr.rel (0) target = $region13
    $region12: #{tpu_custom_call.1} parent=1 // pred_region
      %s20 = ssub.s32 256, 256
      %21 = vsyncadd [#allocation3], %s20
      %s22 = sshll.u32 [#allocation2], 4
      %s23 = int_to_ptr.vmem [resolvable:$true] %s22
      %28 = dma.hbm_to_vmem [thread:$0]  %s2, 256, %s23, [#allocation3], 64, 64, 4
    $region13: #{tpu_custom_call.1} parent=1 // pred_fallthru
      _
    // Predicated region
    $region14: #{tpu_custom_call.1} parent=1 // pred_check
      _
    $region15: #{tpu_custom_call.1} parent=1 // pred_check_branch
      %30 = sbr.rel (0) target = $region17
    $region16: #{tpu_custom_call.1} parent=1 // pred_region
      _
    $region17: #{tpu_custom_call.1} parent=1 // pred_fallthru
      _
    // Predicated region
    $region18: #{tpu_custom_call.1} parent=1 // pred_check
      _
    $region19: #{tpu_custom_call.1} parent=1 // pred_check_branch
      %32 = sbr.rel (0) target = $region21
    $region20: #{tpu_custom_call.1} parent=1 // pred_region
      _
    $region21: #{tpu_custom_call.1} parent=1 // pred_fallthru
      _
    // Predicated region
    $region22: #{tpu_custom_call.1} parent=1 // pred_check
      _
    $region23: #{tpu_custom_call.1} parent=1 // pred_check_branch
      %34 = sbr.rel (0) target = $region25
    $region24: #{tpu_custom_call.1} parent=1 // pred_region
      _
    $region25: #{tpu_custom_call.1} parent=1 // pred_fallthru
      _
    // Predicated region
    $region26: #{tpu_custom_call.1} parent=1 // pred_check
      _
    $region27: #{tpu_custom_call.1} parent=1 // pred_check_branch
      %36 = sbr.rel (0) target = $region29
    $region28: #{tpu_custom_call.1} parent=1 // pred_region
      %37 = dma.done [#allocation3], 256
    $region29: #{tpu_custom_call.1} parent=1 // pred_fallthru
      _
    %v40 = vld [vmem:[%s0] sm:$0xf]
    %v41 = vld [vmem:[%s0 + $0x4] sm:$0xf]
    %v42 = vld [vmem:[%s0 + $0x8] sm:$0xf]
    %v43 = vld [vmem:[%s0 + $0xc] sm:$0xf]
    %v44 = vld [vmem:[%s0 + $0x10] sm:$0xf]
    %v45 = vld [vmem:[%s0 + $0x14] sm:$0xf]
    %v46 = vld [vmem:[%s0 + $0x18] sm:$0xf]
    %v47 = vld [vmem:[%s0 + $0x1c] sm:$0xf]
    %v48 = vld [vmem:[%s1] sm:$0xf]
    %v49 = vld [vmem:[%s1 + $0x4] sm:$0xf]
    %v50 = vld [vmem:[%s1 + $0x8] sm:$0xf]
    %v51 = vld [vmem:[%s1 + $0xc] sm:$0xf]
    %v52 = vld [vmem:[%s3] sm:$0x1]
    %v54 = vlaneseq
    %v55 = vshrl.u32 %v54, 7
    %v56 = vsub.s32 0, %v55
    %v57 = vrot.slane %v52, %v56
    %v67 = vunpack.c.l.b16 %v40
    %v68 = vunpack.c.l.b16 %v41
    %v69 = vunpack.c.l.b16 %v42
    %v70 = vunpack.c.l.b16 %v43
    %v71 = vunpack.c.l.b16 %v44
    %v72 = vunpack.c.l.b16 %v45
    %v73 = vunpack.c.l.b16 %v46
    %v74 = vunpack.c.l.b16 %v47
    %v75 = vpack.c.b16 %v68, %v67
    %v76 = vpack.c.b16 %v70, %v69
    %v77 = vpack.c.b16 %v72, %v71
    %v78 = vpack.c.b16 %v74, %v73
    %v83 = vunpack.c.l.b16 %v48
    %v84 = vunpack.c.l.b16 %v49
    %v85 = vunpack.c.l.b16 %v50
    %v86 = vunpack.c.l.b16 %v51
    %v87 = vpack.c.b16 %v84, %v83
    %v88 = vpack.c.b16 %v86, %v85
    %vm91 = vcmask 261120
    %v93 = vsel %vm91, %v75, 0
    %v96 = vsel %vm91, %v76, 0
    %v99 = vsel %vm91, %v77, 0
    %v102 = vsel %vm91, %v78, 0
    %104 = vmatprep.subr.bf16.mxu0 0
    %105 = vmatpush1.bf16.msra.mxu0 %v87
    %106 = vmatprep.subr.bf16.mxu0 0
    %107 = vmatpush1.bf16.msra.mxu0 %v88
    %108 = vmatprep.subr.bf16.mxu0 0
    %109 = vmatpush1.bf16.msra.mxu0 0
    %110 = vmatprep.subr.bf16.mxu0 0
    %111 = vmatpush1.bf16.msra.mxu0 0
    %112 = vmatprep.subr.bf16.mxu0 0
    %113 = vmatpush1.bf16.msra.mxu0 0
    %114 = vmatprep.subr.bf16.mxu0 0
    %115 = vmatpush1.bf16.msra.mxu0 0
    %116 = vmatprep.subr.bf16.mxu0 0
    %117 = vmatpush1.bf16.msra.mxu0 0
    %118 = vmatprep.subr.bf16.mxu0 0
    %119 = vmatpush1.bf16.msra.mxu0 0
    %120 = vmatprep.subr.bf16.mxu0 0
    %121 = vmatpush1.bf16.msra.mxu0 0
    %122 = vmatprep.subr.bf16.mxu0 0
    %123 = vmatpush1.bf16.msra.mxu0 0
    %124 = vmatprep.subr.bf16.mxu0 0
    %125 = vmatpush1.bf16.msra.mxu0 0
    %126 = vmatprep.subr.bf16.mxu0 0
    %127 = vmatpush1.bf16.msra.mxu0 0
    %128 = vmatprep.subr.bf16.mxu0 0
    %129 = vmatpush1.bf16.msra.mxu0 0
    %130 = vmatprep.subr.bf16.mxu0 0
    %131 = vmatpush1.bf16.msra.mxu0 0
    %132 = vmatprep.subr.bf16.mxu0 0
    %133 = vmatpush1.bf16.msra.mxu0 0
    %134 = vmatprep.subr.bf16.mxu0 0
    %135 = vmatpush1.bf16.msra.mxu0 0
    %136 = vmatprep.mubr.bf16.mxu0 0
    %137 = vmatmul.mubr.bf16.gmra.mrb[0].mxu0 %v93
    %v138 = vpop.f32.mrb[0].mxu0
    %v139 = vadd.f32 %v57, %v138
    %v140 = vpop.f32.mrb[0].mxu0
    %v141 = vpop.f32.mrb[0].mxu0
    %v142 = vadd.f32 %v57, %v141
    %v143 = vpop.f32.mrb[0].mxu0
    %144 = vmatprep.mubr.bf16.mxu0 0
    %145 = vmatmul.mubr.bf16.gmra.mrb[0].mxu0 %v96
    %v146 = vpop.f32.mrb[0].mxu0
    %v147 = vadd.f32 %v57, %v146
    %v148 = vpop.f32.mrb[0].mxu0
    %v149 = vpop.f32.mrb[0].mxu0
    %v150 = vadd.f32 %v57, %v149
    %v151 = vpop.f32.mrb[0].mxu0
    %152 = vmatprep.mubr.bf16.mxu0 0
    %153 = vmatmul.mubr.bf16.gmra.mrb[0].mxu0 %v99
    %v154 = vpop.f32.mrb[0].mxu0
    %v155 = vadd.f32 %v57, %v154
    %v156 = vpop.f32.mrb[0].mxu0
    %v157 = vpop.f32.mrb[0].mxu0
    %v158 = vadd.f32 %v57, %v157
    %v159 = vpop.f32.mrb[0].mxu0
    %160 = vmatprep.mubr.bf16.mxu0 0
    %161 = vmatmul.mubr.bf16.gmra.mrb[0].mxu0 %v102
    %v162 = vpop.f32.mrb[0].mxu0
    %v163 = vadd.f32 %v57, %v162
    %v164 = vpop.f32.mrb[0].mxu0
    %v165 = vpop.f32.mrb[0].mxu0
    %v166 = vadd.f32 %v57, %v165
    %v167 = vpop.f32.mrb[0].mxu0
    %168 = vdwg.mxu0
    %v169 = vld [vmem:[#allocation2] sm:$0xf]
    %v170 = vld [vmem:[#allocation2 + $0x4] sm:$0xf]
    %v171 = vld [vmem:[#allocation2 + $0x8] sm:$0xf]
    %v172 = vld [vmem:[#allocation2 + $0xc] sm:$0xf]
    %v173 = vlaneseq
    %v174 = vand.u32 %v173, 127
    %vm175 = vcmp.ge.s32.totalorder %v174, 64
    %vm176 = vcmp.lt.s32.totalorder %v174, 96
    %vm177 = vmand %vm175, %vm176
    %v182 = vunpack.c.l.b16 %v169
    %v183 = vunpack.c.l.b16 %v170
    %v184 = vunpack.c.l.b16 %v171
    %v185 = vunpack.c.l.b16 %v172
    %v186 = vpack.c.b16 %v183, %v182
    %v187 = vpack.c.b16 %v185, %v184
    %v191 = vsel %vm91, 1065369472, 0
    %193 = vmatprep.subr.bf16.mxu0 0
    %194 = vmatpush1.bf16.msra.mxu0 %v186
    %195 = vmatprep.subr.bf16.mxu0 0
    %196 = vmatpush1.bf16.msra.mxu0 %v187
    %197 = vmatprep.subr.bf16.mxu0 0
    %198 = vmatpush1.bf16.msra.mxu0 0
    %199 = vmatprep.subr.bf16.mxu0 0
    %200 = vmatpush1.bf16.msra.mxu0 0
    %201 = vmatprep.subr.bf16.mxu0 0
    %202 = vmatpush1.bf16.msra.mxu0 0
    %203 = vmatprep.subr.bf16.mxu0 0
    %204 = vmatpush1.bf16.msra.mxu0 0
    %205 = vmatprep.subr.bf16.mxu0 0
    %206 = vmatpush1.bf16.msra.mxu0 0
    %207 = vmatprep.subr.bf16.mxu0 0
    %208 = vmatpush1.bf16.msra.mxu0 0
    %209 = vmatprep.subr.bf16.mxu0 0
    %210 = vmatpush1.bf16.msra.mxu0 0
    %211 = vmatprep.subr.bf16.mxu0 0
    %212 = vmatpush1.bf16.msra.mxu0 0
    %213 = vmatprep.subr.bf16.mxu0 0
    %214 = vmatpush1.bf16.msra.mxu0 0
    %215 = vmatprep.subr.bf16.mxu0 0
    %216 = vmatpush1.bf16.msra.mxu0 0
    %217 = vmatprep.subr.bf16.mxu0 0
    %218 = vmatpush1.bf16.msra.mxu0 0
    %219 = vmatprep.subr.bf16.mxu0 0
    %220 = vmatpush1.bf16.msra.mxu0 0
    %221 = vmatprep.subr.bf16.mxu0 0
    %222 = vmatpush1.bf16.msra.mxu0 0
    %223 = vmatprep.subr.bf16.mxu0 0
    %224 = vmatpush1.bf16.msra.mxu0 0
    %225 = vmatprep.mubr.bf16.mxu0 0
    %226 = vmatmul.mubr.bf16.gmra.mrb[0].mxu0 %v191
    %v227 = vpop.f32.mrb[0].mxu0
    %v228 = vadd.f32 0.0, %v227
    %v229 = vpop.f32.mrb[0].mxu0
    %v230 = vpop.f32.mrb[0].mxu0
    %v231 = vpop.f32.mrb[0].mxu0
    %232 = vdwg.mxu0
    %v233 = vadd.f32 %v139, %v228
    %v234 = vtanh.pop %v233
    %v235 = vxor.u32 %v233, 2147483648
    %v236 = vmul.f32 %v235, 1.442695
    %v237 = vpow.pop %v236
    %v238 = vadd.f32 %v237, 1.0
    %v239 = vrcp.pop %v238
    %v240 = vmul.f32 1.0, %v239
    %v241 = vsel %vm177, %v234, %v240
    %243 = vrot.lane.b32.xlu0 %v241, 64
    %v244 = vpop.permute.xlu0 %243
    %v246 = vmul.f32 %v241, %v244
    %248 = vrot.lane.b32.xlu0 %v246, 32
    %v249 = vpop.permute.xlu0 %248
    %v251 = vadd.f32 %v241, %v249
    %v252 = vtanh.pop %v251
    %254 = vrot.lane.b32.xlu0 %v252, 64
    %v255 = vpop.permute.xlu0 %254
    %v257 = vmul.f32 %v241, %v255
    %v258 = vpack.c.bf16 %v257, %v257
    %260 = vrot.lane.b32.xlu0 %v258, 32
    %v261 = vpop.permute.xlu0 %260
    %v263 = vsel %vm91, %v261, 0
    %265 = vmatprep.subr.bf16.mxu0 0
    %266 = vmatpush1.bf16.msra.mxu0 %v186
    %267 = vmatprep.subr.bf16.mxu0 0
    %268 = vmatpush1.bf16.msra.mxu0 %v187
    %269 = vmatprep.subr.bf16.mxu0 0
    %270 = vmatpush1.bf16.msra.mxu0 0
    %271 = vmatprep.subr.bf16.mxu0 0
    %272 = vmatpush1.bf16.msra.mxu0 0
    %273 = vmatprep.subr.bf16.mxu0 0
    %274 = vmatpush1.bf16.msra.mxu0 0
    %275 = vmatprep.subr.bf16.mxu0 0
    %276 = vmatpush1.bf16.msra.mxu0 0
    %277 = vmatprep.subr.bf16.mxu0 0
    %278 = vmatpush1.bf16.msra.mxu0 0
    %279 = vmatprep.subr.bf16.mxu0 0
    %280 = vmatpush1.bf16.msra.mxu0 0
    %281 = vmatprep.subr.bf16.mxu0 0
    %282 = vmatpush1.bf16.msra.mxu0 0
    %283 = vmatprep.subr.bf16.mxu0 0
    %284 = vmatpush1.bf16.msra.mxu0 0
    %285 = vmatprep.subr.bf16.mxu0 0
    %286 = vmatpush1.bf16.msra.mxu0 0
    %287 = vmatprep.subr.bf16.mxu0 0
    %288 = vmatpush1.bf16.msra.mxu0 0
    %289 = vmatprep.subr.bf16.mxu0 0
    %290 = vmatpush1.bf16.msra.mxu0 0
    %291 = vmatprep.subr.bf16.mxu0 0
    %292 = vmatpush1.bf16.msra.mxu0 0
    %293 = vmatprep.subr.bf16.mxu0 0
    %294 = vmatpush1.bf16.msra.mxu0 0
    %295 = vmatprep.subr.bf16.mxu0 0
    %296 = vmatpush1.bf16.msra.mxu0 0
    %297 = vmatprep.mubr.bf16.mxu0 0
    %298 = vmatmul.mubr.bf16.gmra.mrb[0].mxu0 %v263
    %v299 = vpop.f32.mrb[0].mxu0
    %v300 = vadd.f32 0.0, %v299
    %v301 = vpop.f32.mrb[0].mxu0
    %v302 = vpop.f32.mrb[0].mxu0
    %v303 = vpop.f32.mrb[0].mxu0
    %304 = vdwg.mxu0
    %v305 = vadd.f32 %v142, %v300
    %v306 = vtanh.pop %v305
    %v307 = vxor.u32 %v305, 2147483648
    %v308 = vmul.f32 %v307, 1.442695
    %v309 = vpow.pop %v308
    %v310 = vadd.f32 %v309, 1.0
    %v311 = vrcp.pop %v310
    %v312 = vmul.f32 1.0, %v311
    %v313 = vsel %vm177, %v306, %v312
    %v314 = vmul.f32 %v313, %v251
    %316 = vrot.lane.b32.xlu0 %v313, 64
    %v317 = vpop.permute.xlu0 %316
    %v319 = vmul.f32 %v313, %v317
    %321 = vrot.lane.b32.xlu0 %v319, 32
    %v322 = vpop.permute.xlu0 %321
    %v324 = vadd.f32 %v314, %v322
    %v325 = vtanh.pop %v324
    %327 = vrot.lane.b32.xlu0 %v325, 64
    %v328 = vpop.permute.xlu0 %327
    %v330 = vmul.f32 %v313, %v328
    %v331 = vpack.c.bf16 %v330, %v330
    %333 = vrot.lane.b32.xlu0 %v331, 32
    %v334 = vpop.permute.xlu0 %333
    %v336 = vsel %vm91, %v334, 0
    %338 = vmatprep.subr.bf16.mxu0 0
    %339 = vmatpush1.bf16.msra.mxu0 %v186
    %340 = vmatprep.subr.bf16.mxu0 0
    %341 = vmatpush1.bf16.msra.mxu0 %v187
    %342 = vmatprep.subr.bf16.mxu0 0
    %343 = vmatpush1.bf16.msra.mxu0 0
    %344 = vmatprep.subr.bf16.mxu0 0
    %345 = vmatpush1.bf16.msra.mxu0 0
    %346 = vmatprep.subr.bf16.mxu0 0
    %347 = vmatpush1.bf16.msra.mxu0 0
    %348 = vmatprep.subr.bf16.mxu0 0
    %349 = vmatpush1.bf16.msra.mxu0 0
    %350 = vmatprep.subr.bf16.mxu0 0
    %351 = vmatpush1.bf16.msra.mxu0 0
    %352 = vmatprep.subr.bf16.mxu0 0
    %353 = vmatpush1.bf16.msra.mxu0 0
    %354 = vmatprep.subr.bf16.mxu0 0
    %355 = vmatpush1.bf16.msra.mxu0 0
    %356 = vmatprep.subr.bf16.mxu0 0
    %357 = vmatpush1.bf16.msra.mxu0 0
    %358 = vmatprep.subr.bf16.mxu0 0
    %359 = vmatpush1.bf16.msra.mxu0 0
    %360 = vmatprep.subr.bf16.mxu0 0
    %361 = vmatpush1.bf16.msra.mxu0 0
    %362 = vmatprep.subr.bf16.mxu0 0
    %363 = vmatpush1.bf16.msra.mxu0 0
    %364 = vmatprep.subr.bf16.mxu0 0
    %365 = vmatpush1.bf16.msra.mxu0 0
    %366 = vmatprep.subr.bf16.mxu0 0
    %367 = vmatpush1.bf16.msra.mxu0 0
    %368 = vmatprep.subr.bf16.mxu0 0
    %369 = vmatpush1.bf16.msra.mxu0 0
    %370 = vmatprep.mubr.bf16.mxu0 0
    %371 = vmatmul.mubr.bf16.gmra.mrb[0].mxu0 %v336
    %v372 = vpop.f32.mrb[0].mxu0
    %v373 = vadd.f32 0.0, %v372
    %v374 = vpop.f32.mrb[0].mxu0
    %v375 = vpop.f32.mrb[0].mxu0
    %v376 = vpop.f32.mrb[0].mxu0
    %377 = vdwg.mxu0
    %v378 = vadd.f32 %v147, %v373
    %v379 = vtanh.pop %v378
    %v380 = vxor.u32 %v378, 2147483648
    %v381 = vmul.f32 %v380, 1.442695
    %v382 = vpow.pop %v381
    %v383 = vadd.f32 %v382, 1.0
    %v384 = vrcp.pop %v383
    %v385 = vmul.f32 1.0, %v384
    %v386 = vsel %vm177, %v379, %v385
    %v387 = vmul.f32 %v386, %v324
    %389 = vrot.lane.b32.xlu0 %v386, 64
    %v390 = vpop.permute.xlu0 %389
    %v392 = vmul.f32 %v386, %v390
    %394 = vrot.lane.b32.xlu0 %v392, 32
    %v395 = vpop.permute.xlu0 %394
    %v397 = vadd.f32 %v387, %v395
    %v398 = vtanh.pop %v397
    %400 = vrot.lane.b32.xlu0 %v398, 64
    %v401 = vpop.permute.xlu0 %400
    %v403 = vmul.f32 %v386, %v401
    %v404 = vpack.c.bf16 %v403, %v403
    %406 = vrot.lane.b32.xlu0 %v404, 32
    %v407 = vpop.permute.xlu0 %406
    %v409 = vsel %vm91, %v407, 0
    %411 = vmatprep.subr.bf16.mxu0 0
    %412 = vmatpush1.bf16.msra.mxu0 %v186
    %413 = vmatprep.subr.bf16.mxu0 0
    %414 = vmatpush1.bf16.msra.mxu0 %v187
    %415 = vmatprep.subr.bf16.mxu0 0
    %416 = vmatpush1.bf16.msra.mxu0 0
    %417 = vmatprep.subr.bf16.mxu0 0
    %418 = vmatpush1.bf16.msra.mxu0 0
    %419 = vmatprep.subr.bf16.mxu0 0
    %420 = vmatpush1.bf16.msra.mxu0 0
    %421 = vmatprep.subr.bf16.mxu0 0
    %422 = vmatpush1.bf16.msra.mxu0 0
    %423 = vmatprep.subr.bf16.mxu0 0
    %424 = vmatpush1.bf16.msra.mxu0 0
    %425 = vmatprep.subr.bf16.mxu0 0
    %426 = vmatpush1.bf16.msra.mxu0 0
    %427 = vmatprep.subr.bf16.mxu0 0
    %428 = vmatpush1.bf16.msra.mxu0 0
    %429 = vmatprep.subr.bf16.mxu0 0
    %430 = vmatpush1.bf16.msra.mxu0 0
    %431 = vmatprep.subr.bf16.mxu0 0
    %432 = vmatpush1.bf16.msra.mxu0 0
    %433 = vmatprep.subr.bf16.mxu0 0
    %434 = vmatpush1.bf16.msra.mxu0 0
    %435 = vmatprep.subr.bf16.mxu0 0
    %436 = vmatpush1.bf16.msra.mxu0 0
    %437 = vmatprep.subr.bf16.mxu0 0
    %438 = vmatpush1.bf16.msra.mxu0 0
    %439 = vmatprep.subr.bf16.mxu0 0
    %440 = vmatpush1.bf16.msra.mxu0 0
    %441 = vmatprep.subr.bf16.mxu0 0
    %442 = vmatpush1.bf16.msra.mxu0 0
    %443 = vmatprep.mubr.bf16.mxu0 0
    %444 = vmatmul.mubr.bf16.gmra.mrb[0].mxu0 %v409
    %v445 = vpop.f32.mrb[0].mxu0
    %v446 = vadd.f32 0.0, %v445
    %v447 = vpop.f32.mrb[0].mxu0
    %v448 = vpop.f32.mrb[0].mxu0
    %v449 = vpop.f32.mrb[0].mxu0
    %450 = vdwg.mxu0
    %v451 = vadd.f32 %v150, %v446
    %v452 = vtanh.pop %v451
    %v453 = vxor.u32 %v451, 2147483648
    %v454 = vmul.f32 %v453, 1.442695
    %v455 = vpow.pop %v454
    %v456 = vadd.f32 %v455, 1.0
    %v457 = vrcp.pop %v456
    %v458 = vmul.f32 1.0, %v457
    %v459 = vsel %vm177, %v452, %v458
    %v460 = vmul.f32 %v459, %v397
    %462 = vrot.lane.b32.xlu0 %v459, 64
    %v463 = vpop.permute.xlu0 %462
    %v465 = vmul.f32 %v459, %v463
    %467 = vrot.lane.b32.xlu0 %v465, 32
    %v468 = vpop.permute.xlu0 %467
    %v470 = vadd.f32 %v460, %v468
    %v471 = vtanh.pop %v470
    %473 = vrot.lane.b32.xlu0 %v471, 64
    %v474 = vpop.permute.xlu0 %473
    %v476 = vmul.f32 %v459, %v474
    %v477 = vpack.c.bf16 %v476, %v476
    %479 = vrot.lane.b32.xlu0 %v477, 32
    %v480 = vpop.permute.xlu0 %479
    %v482 = vsel %vm91, %v480, 0
    %484 = vmatprep.subr.bf16.mxu0 0
    %485 = vmatpush1.bf16.msra.mxu0 %v186
    %486 = vmatprep.subr.bf16.mxu0 0
    %487 = vmatpush1.bf16.msra.mxu0 %v187
    %488 = vmatprep.subr.bf16.mxu0 0
    %489 = vmatpush1.bf16.msra.mxu0 0
    %490 = vmatprep.subr.bf16.mxu0 0
    %491 = vmatpush1.bf16.msra.mxu0 0
    %492 = vmatprep.subr.bf16.mxu0 0
    %493 = vmatpush1.bf16.msra.mxu0 0
    %494 = vmatprep.subr.bf16.mxu0 0
    %495 = vmatpush1.bf16.msra.mxu0 0
    %496 = vmatprep.subr.bf16.mxu0 0
    %497 = vmatpush1.bf16.msra.mxu0 0
    %498 = vmatprep.subr.bf16.mxu0 0
    %499 = vmatpush1.bf16.msra.mxu0 0
    %500 = vmatprep.subr.bf16.mxu0 0
    %501 = vmatpush1.bf16.msra.mxu0 0
    %502 = vmatprep.subr.bf16.mxu0 0
    %503 = vmatpush1.bf16.msra.mxu0 0
    %504 = vmatprep.subr.bf16.mxu0 0
    %505 = vmatpush1.bf16.msra.mxu0 0
    %506 = vmatprep.subr.bf16.mxu0 0
    %507 = vmatpush1.bf16.msra.mxu0 0
    %508 = vmatprep.subr.bf16.mxu0 0
    %509 = vmatpush1.bf16.msra.mxu0 0
    %510 = vmatprep.subr.bf16.mxu0 0
    %511 = vmatpush1.bf16.msra.mxu0 0
    %512 = vmatprep.subr.bf16.mxu0 0
    %513 = vmatpush1.bf16.msra.mxu0 0
    %514 = vmatprep.subr.bf16.mxu0 0
    %515 = vmatpush1.bf16.msra.mxu0 0
    %516 = vmatprep.mubr.bf16.mxu0 0
    %517 = vmatmul.mubr.bf16.gmra.mrb[0].mxu0 %v482
    %v518 = vpop.f32.mrb[0].mxu0
    %v519 = vadd.f32 0.0, %v518
    %v520 = vpop.f32.mrb[0].mxu0
    %v521 = vpop.f32.mrb[0].mxu0
    %v522 = vpop.f32.mrb[0].mxu0
    %523 = vdwg.mxu0
    %v524 = vadd.f32 %v155, %v519
    %v525 = vtanh.pop %v524
    %v526 = vxor.u32 %v524, 2147483648
    %v527 = vmul.f32 %v526, 1.442695
    %v528 = vpow.pop %v527
    %v529 = vadd.f32 %v528, 1.0
    %v530 = vrcp.pop %v529
    %v531 = vmul.f32 1.0, %v530
    %v532 = vsel %vm177, %v525, %v531
    %v533 = vmul.f32 %v532, %v470
    %535 = vrot.lane.b32.xlu0 %v532, 64
    %v536 = vpop.permute.xlu0 %535
    %v538 = vmul.f32 %v532, %v536
    %540 = vrot.lane.b32.xlu0 %v538, 32
    %v541 = vpop.permute.xlu0 %540
    %v543 = vadd.f32 %v533, %v541
    %v544 = vtanh.pop %v543
    %546 = vrot.lane.b32.xlu0 %v544, 64
    %v547 = vpop.permute.xlu0 %546
    %v549 = vmul.f32 %v532, %v547
    %v550 = vpack.c.bf16 %v549, %v549
    %552 = vrot.lane.b32.xlu0 %v550, 32
    %v553 = vpop.permute.xlu0 %552
    %v555 = vsel %vm91, %v553, 0
    %557 = vmatprep.subr.bf16.mxu0 0
    %558 = vmatpush1.bf16.msra.mxu0 %v186
    %559 = vmatprep.subr.bf16.mxu0 0
    %560 = vmatpush1.bf16.msra.mxu0 %v187
    %561 = vmatprep.subr.bf16.mxu0 0
    %562 = vmatpush1.bf16.msra.mxu0 0
    %563 = vmatprep.subr.bf16.mxu0 0
    %564 = vmatpush1.bf16.msra.mxu0 0
    %565 = vmatprep.subr.bf16.mxu0 0
    %566 = vmatpush1.bf16.msra.mxu0 0
    %567 = vmatprep.subr.bf16.mxu0 0
    %568 = vmatpush1.bf16.msra.mxu0 0
    %569 = vmatprep.subr.bf16.mxu0 0
    %570 = vmatpush1.bf16.msra.mxu0 0
    %571 = vmatprep.subr.bf16.mxu0 0
    %572 = vmatpush1.bf16.msra.mxu0 0
    %573 = vmatprep.subr.bf16.mxu0 0
    %574 = vmatpush1.bf16.msra.mxu0 0
    %575 = vmatprep.subr.bf16.mxu0 0
    %576 = vmatpush1.bf16.msra.mxu0 0
    %577 = vmatprep.subr.bf16.mxu0 0
    %578 = vmatpush1.bf16.msra.mxu0 0
    %579 = vmatprep.subr.bf16.mxu0 0
    %580 = vmatpush1.bf16.msra.mxu0 0
    %581 = vmatprep.subr.bf16.mxu0 0
    %582 = vmatpush1.bf16.msra.mxu0 0
    %583 = vmatprep.subr.bf16.mxu0 0
    %584 = vmatpush1.bf16.msra.mxu0 0
    %585 = vmatprep.subr.bf16.mxu0 0
    %586 = vmatpush1.bf16.msra.mxu0 0
    %587 = vmatprep.subr.bf16.mxu0 0
    %588 = vmatpush1.bf16.msra.mxu0 0
    %589 = vmatprep.mubr.bf16.mxu0 0
    %590 = vmatmul.mubr.bf16.gmra.mrb[0].mxu0 %v555
    %v591 = vpop.f32.mrb[0].mxu0
    %v592 = vadd.f32 0.0, %v591
    %v593 = vpop.f32.mrb[0].mxu0
    %v594 = vpop.f32.mrb[0].mxu0
    %v595 = vpop.f32.mrb[0].mxu0
    %596 = vdwg.mxu0
    %v597 = vadd.f32 %v158, %v592
    %v598 = vtanh.pop %v597
    %v599 = vxor.u32 %v597, 2147483648
    %v600 = vmul.f32 %v599, 1.442695
    %v601 = vpow.pop %v600
    %v602 = vadd.f32 %v601, 1.0
    %v603 = vrcp.pop %v602
    %v604 = vmul.f32 1.0, %v603
    %v605 = vsel %vm177, %v598, %v604
    %v606 = vmul.f32 %v605, %v543
    %608 = vrot.lane.b32.xlu0 %v605, 64
    %v609 = vpop.permute.xlu0 %608
    %v611 = vmul.f32 %v605, %v609
    %613 = vrot.lane.b32.xlu0 %v611, 32
    %v614 = vpop.permute.xlu0 %613
    %v616 = vadd.f32 %v606, %v614
    %v617 = vtanh.pop %v616
    %619 = vrot.lane.b32.xlu0 %v617, 64
    %v620 = vpop.permute.xlu0 %619
    %v622 = vmul.f32 %v605, %v620
    %v623 = vpack.c.bf16 %v622, %v622
    %625 = vrot.lane.b32.xlu0 %v623, 32
    %v626 = vpop.permute.xlu0 %625
    %v628 = vsel %vm91, %v626, 0
    %630 = vmatprep.subr.bf16.mxu0 0
    %631 = vmatpush1.bf16.msra.mxu0 %v186
    %632 = vmatprep.subr.bf16.mxu0 0
    %633 = vmatpush1.bf16.msra.mxu0 %v187
    %634 = vmatprep.subr.bf16.mxu0 0
    %635 = vmatpush1.bf16.msra.mxu0 0
    %636 = vmatprep.subr.bf16.mxu0 0
    %637 = vmatpush1.bf16.msra.mxu0 0
    %638 = vmatprep.subr.bf16.mxu0 0
    %639 = vmatpush1.bf16.msra.mxu0 0
    %640 = vmatprep.subr.bf16.mxu0 0
    %641 = vmatpush1.bf16.msra.mxu0 0
    %642 = vmatprep.subr.bf16.mxu0 0
    %643 = vmatpush1.bf16.msra.mxu0 0
    %644 = vmatprep.subr.bf16.mxu0 0
    %645 = vmatpush1.bf16.msra.mxu0 0
    %646 = vmatprep.subr.bf16.mxu0 0
    %647 = vmatpush1.bf16.msra.mxu0 0
    %648 = vmatprep.subr.bf16.mxu0 0
    %649 = vmatpush1.bf16.msra.mxu0 0
    %650 = vmatprep.subr.bf16.mxu0 0
    %651 = vmatpush1.bf16.msra.mxu0 0
    %652 = vmatprep.subr.bf16.mxu0 0
    %653 = vmatpush1.bf16.msra.mxu0 0
    %654 = vmatprep.subr.bf16.mxu0 0
    %655 = vmatpush1.bf16.msra.mxu0 0
    %656 = vmatprep.subr.bf16.mxu0 0
    %657 = vmatpush1.bf16.msra.mxu0 0
    %658 = vmatprep.subr.bf16.mxu0 0
    %659 = vmatpush1.bf16.msra.mxu0 0
    %660 = vmatprep.subr.bf16.mxu0 0
    %661 = vmatpush1.bf16.msra.mxu0 0
    %662 = vmatprep.mubr.bf16.mxu0 0
    %663 = vmatmul.mubr.bf16.gmra.mrb[0].mxu0 %v628
    %v664 = vpop.f32.mrb[0].mxu0
    %v665 = vadd.f32 0.0, %v664
    %v666 = vpop.f32.mrb[0].mxu0
    %v667 = vpop.f32.mrb[0].mxu0
    %v668 = vpop.f32.mrb[0].mxu0
    %669 = vdwg.mxu0
    %v670 = vadd.f32 %v163, %v665
    %v671 = vtanh.pop %v670
    %v672 = vxor.u32 %v670, 2147483648
    %v673 = vmul.f32 %v672, 1.442695
    %v674 = vpow.pop %v673
    %v675 = vadd.f32 %v674, 1.0
    %v676 = vrcp.pop %v675
    %v677 = vmul.f32 1.0, %v676
    %v678 = vsel %vm177, %v671, %v677
    %v679 = vmul.f32 %v678, %v616
    %681 = vrot.lane.b32.xlu0 %v678, 64
    %v682 = vpop.permute.xlu0 %681
    %v684 = vmul.f32 %v678, %v682
    %686 = vrot.lane.b32.xlu0 %v684, 32
    %v687 = vpop.permute.xlu0 %686
    %v689 = vadd.f32 %v679, %v687
    %v690 = vtanh.pop %v689
    %692 = vrot.lane.b32.xlu0 %v690, 64
    %v693 = vpop.permute.xlu0 %692
    %v695 = vmul.f32 %v678, %v693
    %v696 = vpack.c.bf16 %v695, %v695
    %698 = vrot.lane.b32.xlu0 %v696, 32
    %v699 = vpop.permute.xlu0 %698
    %v701 = vsel %vm91, %v699, 0
    %703 = vmatprep.subr.bf16.mxu0 0
    %704 = vmatpush1.bf16.msra.mxu0 %v186
    %705 = vmatprep.subr.bf16.mxu0 0
    %706 = vmatpush1.bf16.msra.mxu0 %v187
    %707 = vmatprep.subr.bf16.mxu0 0
    %708 = vmatpush1.bf16.msra.mxu0 0
    %709 = vmatprep.subr.bf16.mxu0 0
    %710 = vmatpush1.bf16.msra.mxu0 0
    %711 = vmatprep.subr.bf16.mxu0 0
    %712 = vmatpush1.bf16.msra.mxu0 0
    %713 = vmatprep.subr.bf16.mxu0 0
    %714 = vmatpush1.bf16.msra.mxu0 0
    %715 = vmatprep.subr.bf16.mxu0 0
    %716 = vmatpush1.bf16.msra.mxu0 0
    %717 = vmatprep.subr.bf16.mxu0 0
    %718 = vmatpush1.bf16.msra.mxu0 0
    %719 = vmatprep.subr.bf16.mxu0 0
    %720 = vmatpush1.bf16.msra.mxu0 0
    %721 = vmatprep.subr.bf16.mxu0 0
    %722 = vmatpush1.bf16.msra.mxu0 0
    %723 = vmatprep.subr.bf16.mxu0 0
    %724 = vmatpush1.bf16.msra.mxu0 0
    %725 = vmatprep.subr.bf16.mxu0 0
    %726 = vmatpush1.bf16.msra.mxu0 0
    %727 = vmatprep.subr.bf16.mxu0 0
    %728 = vmatpush1.bf16.msra.mxu0 0
    %729 = vmatprep.subr.bf16.mxu0 0
    %730 = vmatpush1.bf16.msra.mxu0 0
    %731 = vmatprep.subr.bf16.mxu0 0
    %732 = vmatpush1.bf16.msra.mxu0 0
    %733 = vmatprep.subr.bf16.mxu0 0
    %734 = vmatpush1.bf16.msra.mxu0 0
    %735 = vmatprep.mubr.bf16.mxu0 0
    %736 = vmatmul.mubr.bf16.gmra.mrb[0].mxu0 %v701
    %v737 = vpop.f32.mrb[0].mxu0
    %v738 = vadd.f32 0.0, %v737
    %v739 = vpop.f32.mrb[0].mxu0
    %v740 = vpop.f32.mrb[0].mxu0
    %v741 = vpop.f32.mrb[0].mxu0
    %742 = vdwg.mxu0
    %v743 = vadd.f32 %v166, %v738
    %v744 = vtanh.pop %v743
    %v745 = vxor.u32 %v743, 2147483648
    %v746 = vmul.f32 %v745, 1.442695
    %v747 = vpow.pop %v746
    %v748 = vadd.f32 %v747, 1.0
    %v749 = vrcp.pop %v748
    %v750 = vmul.f32 1.0, %v749
    %v751 = vsel %vm177, %v744, %v750
    %v752 = vmul.f32 %v751, %v689
    %754 = vrot.lane.b32.xlu0 %v751, 64
    %v755 = vpop.permute.xlu0 %754
    %v757 = vmul.f32 %v751, %v755
    %759 = vrot.lane.b32.xlu0 %v757, 32
    %v760 = vpop.permute.xlu0 %759
    %v762 = vadd.f32 %v752, %v760
    %v763 = vtanh.pop %v762
    %765 = vrot.lane.b32.xlu0 %v763, 64
    %v766 = vpop.permute.xlu0 %765
    %v768 = vmul.f32 %v751, %v766
    %v769 = vld [vmem:[%s4] sm:$0xff]
    %v770 = vld [vmem:[%s4 + $0x8] sm:$0xff]
    %v771 = vld [vmem:[%s4 + $0x10] sm:$0xff]
    %v772 = vld [vmem:[%s4 + $0x18] sm:$0xff]
    %v773 = vld [vmem:[%s5] sm:$0x1]
    %v775 = vlaneseq
    %v776 = vshrl.u32 %v775, 7
    %v777 = vsub.s32 0, %v776
    %v778 = vrot.slane %v773, %v777
    %781 = vrot.lane.b32.xlu0 %v768, 32
    %v782 = vpop.permute.xlu0 %781
    %v783 = vsel %vm91, %v782, 0
    %785 = vmatprep.subr.mxu0 0.0
    %786 = vmatpush1.msra.mxu0 %v769
    %787 = vmatprep.subr.mxu0 0.0
    %788 = vmatpush1.msra.mxu0 %v770
    %789 = vmatprep.subr.mxu0 0.0
    %790 = vmatpush1.msra.mxu0 %v771
    %791 = vmatprep.subr.mxu0 0.0
    %792 = vmatpush1.msra.mxu0 %v772
    %793 = vmatprep.subr.mxu0 0.0
    %794 = vmatpush1.msra.mxu0 0.0
    %795 = vmatprep.subr.mxu0 0.0
    %796 = vmatpush1.msra.mxu0 0.0
    %797 = vmatprep.subr.mxu0 0.0
    %798 = vmatpush1.msra.mxu0 0.0
    %799 = vmatprep.subr.mxu0 0.0
    %800 = vmatpush1.msra.mxu0 0.0
    %801 = vmatprep.subr.mxu0 0.0
    %802 = vmatpush1.msra.mxu0 0.0
    %803 = vmatprep.subr.mxu0 0.0
    %804 = vmatpush1.msra.mxu0 0.0
    %805 = vmatprep.subr.mxu0 0.0
    %806 = vmatpush1.msra.mxu0 0.0
    %807 = vmatprep.subr.mxu0 0.0
    %808 = vmatpush1.msra.mxu0 0.0
    %809 = vmatprep.subr.mxu0 0.0
    %810 = vmatpush1.msra.mxu0 0.0
    %811 = vmatprep.subr.mxu0 0.0
    %812 = vmatpush1.msra.mxu0 0.0
    %813 = vmatprep.subr.mxu0 0.0
    %814 = vmatpush1.msra.mxu0 0.0
    %815 = vmatprep.subr.mxu0 0.0
    %816 = vmatpush1.msra.mxu0 0.0
    %817 = vmatprep.subr.mxu0 0.0
    %818 = vmatpush1.msra.mxu0 0.0
    %819 = vmatprep.subr.mxu0 0.0
    %820 = vmatpush1.msra.mxu0 0.0
    %821 = vmatprep.subr.mxu0 0.0
    %822 = vmatpush1.msra.mxu0 0.0
    %823 = vmatprep.subr.mxu0 0.0
    %824 = vmatpush1.msra.mxu0 0.0
    %825 = vmatprep.subr.mxu0 0.0
    %826 = vmatpush1.msra.mxu0 0.0
    %827 = vmatprep.subr.mxu0 0.0
    %828 = vmatpush1.msra.mxu0 0.0
    %829 = vmatprep.subr.mxu0 0.0
    %830 = vmatpush1.msra.mxu0 0.0
    %831 = vmatprep.subr.mxu0 0.0
    %832 = vmatpush1.msra.mxu0 0.0
    %833 = vmatprep.subr.mxu0 0.0
    %834 = vmatpush1.msra.mxu0 0.0
    %835 = vmatprep.subr.mxu0 0.0
    %836 = vmatpush1.msra.mxu0 0.0
    %837 = vmatprep.subr.mxu0 0.0
    %838 = vmatpush1.msra.mxu0 0.0
    %839 = vmatprep.subr.mxu0 0.0
    %840 = vmatpush1.msra.mxu0 0.0
    %841 = vmatprep.subr.mxu0 0.0
    %842 = vmatpush1.msra.mxu0 0.0
    %843 = vmatprep.subr.mxu0 0.0
    %844 = vmatpush1.msra.mxu0 0.0
    %845 = vmatprep.subr.mxu0 0.0
    %846 = vmatpush1.msra.mxu0 0.0
    %847 = vmatprep.subr.mxu0 0.0
    %848 = vmatpush1.msra.mxu0 0.0
    %849 = vmatprep.mubr.f32.mxu0 0.0
    %850 = vmatmul.mubr.f32.gmra.mrb[0].mxu0 %v783
    %v851 = vpop.f32.mrb[0].mxu0
    %v852 = vadd.f32 %v778, %v851
    %v853 = vpop.f32.mrb[0].mxu0
    %854 = vdwg.mxu0
    %855 = vst [vmem:[#allocation5] sm:$0xff] %v852
    // Predicated region
    $region30: #{tpu_custom_call.1} parent=1 // pred_check
      _
    $region31: #{tpu_custom_call.1} parent=1 // pred_check_branch
      %857 = sbr.rel (0) target = $region33
    $region32: #{tpu_custom_call.1} parent=1 // pred_region
      %s859 = ssub.s32 128, 128
      %860 = vsyncadd [#allocation4], %s859
      %s862 = sshll.u32 [#allocation5], 4
      %s863 = int_to_ptr.vmem [resolvable:$true] %s862
      %865 = dma.vmem_to_hbm [thread:$0]  %s863, 128, %s6, [#allocation4]
    $region33: #{tpu_custom_call.1} parent=1 // pred_fallthru
      _
    // Predicated region
    $region34: #{tpu_custom_call.1} parent=1 // pred_check
      _
    $region35: #{tpu_custom_call.1} parent=1 // pred_check_branch
      %867 = sbr.rel (0) target = $region37
    $region36: #{tpu_custom_call.1} parent=1 // pred_region
      %868 = dma.done [#allocation4], 128
    $region37: #{tpu_custom_call.1} parent=1 // pred_fallthru
      _
    %869 = vsyncpa [#allocation3], 1
    %870 = vsyncpa [#allocation4], 1

</llo_original>
